<compile_context>
chip_gen: v5e
topology: v5e:2x2
jax: 0.10.0
libtpu: 0.0.40
codegen_flags: <defaults>
</compile_context>

<pallas_src>
import jax
import jax.numpy as jnp
from jax.experimental import pallas as pl
from jax.experimental.pallas import tpu as pltpu

_EPS = 1e-5


def _model_kernel(xw_ref, wt_ref, g_ref, be_ref, o_ref):
    # xw_ref : (K, P)  f32 VMEM  im2col patches, K = CI*KH*KW, P = N*OH*OW
    # wt_ref : (K, CO) f32 VMEM  conv weight, transposed (K on sublanes)
    # g_ref  : (CO, 1) f32 VMEM  bn2 gamma
    # be_ref : (CO, 1) f32 VMEM  bn2 beta
    # o_ref  : (CO, P) f32 VMEM  output: channels on sublanes, (n,oh,ow) flat on lanes
    K, P = xw_ref.shape
    CO = o_ref.shape[0]

    xw = xw_ref[...]
    wt = wt_ref[...]

    # ---- conv1 (valid, stride 1): VPU multiply + XLU sublane reduce per co ----
    # Conv bias intentionally omitted: exactly cancelled by affine-free bn1.
    rows = []
    for co in range(CO):
        wcol = wt[:, co:co + 1]                                    # (K, 1) static lane slice
        rows.append(jnp.sum(xw * wcol, axis=0, keepdims=True))     # (1, P)
    acc = jnp.concatenate(rows, axis=0)                            # (CO, P) lane-dense

    inv_cnt = 1.0 / float(P)

    # ---- bn1 (affine=False), training-mode batch stats per channel ----
    m1 = jnp.sum(acc, axis=-1, keepdims=True) * inv_cnt
    d1 = acc - m1
    v1 = jnp.sum(d1 * d1, axis=-1, keepdims=True) * inv_cnt
    y1 = d1 * jax.lax.rsqrt(v1 + _EPS)

    # ---- bn2 (affine=True) + relu ----
    m2 = jnp.sum(y1, axis=-1, keepdims=True) * inv_cnt
    d2 = y1 - m2
    v2 = jnp.sum(d2 * d2, axis=-1, keepdims=True) * inv_cnt
    y2 = jnp.maximum(d2 * jax.lax.rsqrt(v2 + _EPS) * g_ref[...] + be_ref[...], 0.0)

    # torch's relu before bn3 is a no-op here (y2 >= 0) — skipped.
    # TODO(synk): reference declares BatchNorm2d(2) on a 3-channel tensor (would
    # raise in PyTorch); implemented as per-channel training-mode BN over the
    # actual channels.
    m3 = jnp.sum(y2, axis=-1, keepdims=True) * inv_cnt
    d3 = y2 - m3
    v3 = jnp.sum(d3 * d3, axis=-1, keepdims=True) * inv_cnt
    o_ref[...] = jnp.maximum(d3 * jax.lax.rsqrt(v3 + _EPS), 0.0)


@jax.jit
def model_forward(x, conv_w, bn2_gamma, bn2_beta):
    x = x.astype(jnp.float32)
    conv_w = conv_w.astype(jnp.float32)
    N, CI, H, W = x.shape
    CO, _, KH, KW = conv_w.shape
    OH, OW = H - KH + 1, W - KW + 1
    K, P = CI * KH * KW, N * OH * OW

    # Layout plumbing in XLA (no FLOPs): im2col so the kernel computes and
    # stores on lane-dense (K, P) / (CO, P) slabs.
    cols = [x[:, :, kh:kh + OH, kw:kw + OW]              # (N, CI, OH, OW) each
            for kh in range(KH) for kw in range(KW)]
    xw = jnp.stack(cols, axis=0)                          # (KH*KW, N, CI, OH, OW)
    xw = jnp.transpose(xw, (2, 0, 1, 3, 4)).reshape(K, P)  # (K, P): row = ci*KH*KW+kh*KW+kw
    wt = conv_w.reshape(CO, K).T                          # (K, CO), matches xw row order

    cost = pl.CostEstimate(
        flops=2 * CO * K * P + 12 * CO * P,
        transcendentals=3 * CO,
        bytes_accessed=4 * (K * P + CO * P + K * CO + 2 * CO),
    )

    out_flat = pl.pallas_call(
        _model_kernel,
        out_shape=jax.ShapeDtypeStruct((CO, P), jnp.float32),
        in_specs=[
            pl.BlockSpec(memory_space=pltpu.MemorySpace.VMEM),   # xw (K, P)
            pl.BlockSpec(memory_space=pltpu.MemorySpace.VMEM),   # wT (K, CO)
            pl.BlockSpec(memory_space=pltpu.MemorySpace.VMEM),   # bn2 gamma (CO, 1)
            pl.BlockSpec(memory_space=pltpu.MemorySpace.VMEM),   # bn2 beta  (CO, 1)
        ],
        out_specs=pl.BlockSpec(memory_space=pltpu.MemorySpace.VMEM),
        cost_estimate=cost,
    )(xw, wt,
      bn2_gamma.astype(jnp.float32).reshape(CO, 1),
      bn2_beta.astype(jnp.float32).reshape(CO, 1))

    # Un-flatten back to NCHW in the wrapper (free layout plumbing).
    return jnp.transpose(out_flat.reshape(CO, N, OH, OW), (1, 0, 2, 3))


if __name__ == "__main__":
    key = jax.random.PRNGKey(0)
    kx, kw = jax.random.split(key, 2)

    # Input: NCHW, 3 input channels (module is fixed to 3 in / 3 out channels).
    x = jax.random.normal(kx, (2, 3, 16, 16), dtype=jnp.float32)

    # Deterministic Conv2d(3, 3, 3) weight; conv bias omitted (exactly
    # cancelled by the affine-free training-mode bn1 that follows).
    fan_in = 3 * 3 * 3
    bound = 1.0 / (fan_in ** 0.5)
    conv_w = jax.random.uniform(kw, (3, 3, 3, 3), jnp.float32, -bound, bound)
    bn2_gamma = jnp.ones((3,), jnp.float32)
    bn2_beta = jnp.zeros((3,), jnp.float32)

    out = model_forward(x, conv_w, bn2_gamma, bn2_beta)
    jax.block_until_ready(out)
    assert out.shape == (2, 3, 14, 14)
    print("KERNEL_OK")
</pallas_src>

<mosaic_0001>
module attributes {stable_mosaic.version = 11 : i64} {
  func.func @_model_kernel(%arg0: memref<27x392xf32, #tpu.memory_space<vmem>>, %arg1: memref<27x3xf32, #tpu.memory_space<vmem>>, %arg2: memref<3x1xf32, #tpu.memory_space<vmem>>, %arg3: memref<3x1xf32, #tpu.memory_space<vmem>>, %arg4: memref<3x392xf32, #tpu.memory_space<vmem>>) attributes {dimension_semantics = [], scalar_prefetch = 0 : i64, scratch_operands = 0 : i64, tpu.core_type = #tpu.core_type<tc>} {
    %c0 = arith.constant 0 : index
    %c0_0 = arith.constant 0 : index
    %0 = vector.load %arg0[%c0, %c0_0] : memref<27x392xf32, #tpu.memory_space<vmem>>, vector<27x392xf32>
    %c0_1 = arith.constant 0 : index
    %c0_2 = arith.constant 0 : index
    %1 = vector.load %arg1[%c0_1, %c0_2] : memref<27x3xf32, #tpu.memory_space<vmem>>, vector<27x3xf32>
    %2 = vector.extract_strided_slice %1 {offsets = [0, 0], sizes = [27, 1], strides = [1, 1]} : vector<27x3xf32> to vector<27x1xf32>
    %3 = vector.broadcast %2 : vector<27x1xf32> to vector<27x392xf32>
    %4 = arith.mulf %0, %3 : vector<27x392xf32>
    %cst = arith.constant dense<0.000000e+00> : vector<392xf32>
    %5 = vector.multi_reduction <add>, %4, %cst [0] : vector<27x392xf32> to vector<392xf32>
    %6 = vector.shape_cast %5 : vector<392xf32> to vector<1x392xf32>
    %7 = vector.extract_strided_slice %1 {offsets = [0, 1], sizes = [27, 1], strides = [1, 1]} : vector<27x3xf32> to vector<27x1xf32>
    %8 = vector.broadcast %7 : vector<27x1xf32> to vector<27x392xf32>
    %9 = arith.mulf %0, %8 : vector<27x392xf32>
    %cst_3 = arith.constant dense<0.000000e+00> : vector<392xf32>
    %10 = vector.multi_reduction <add>, %9, %cst_3 [0] : vector<27x392xf32> to vector<392xf32>
    %11 = vector.shape_cast %10 : vector<392xf32> to vector<1x392xf32>
    %12 = vector.extract_strided_slice %1 {offsets = [0, 2], sizes = [27, 1], strides = [1, 1]} : vector<27x3xf32> to vector<27x1xf32>
    %13 = vector.broadcast %12 : vector<27x1xf32> to vector<27x392xf32>
    %14 = arith.mulf %0, %13 : vector<27x392xf32>
    %cst_4 = arith.constant dense<0.000000e+00> : vector<392xf32>
    %15 = vector.multi_reduction <add>, %14, %cst_4 [0] : vector<27x392xf32> to vector<392xf32>
    %16 = vector.shape_cast %15 : vector<392xf32> to vector<1x392xf32>
    %17 = tpu.concatenate %6, %11, %16 in 0 : vector<1x392xf32>, vector<1x392xf32>, vector<1x392xf32> -> vector<3x392xf32>
    %cst_5 = arith.constant dense<0.000000e+00> : vector<3xf32>
    %18 = vector.multi_reduction <add>, %17, %cst_5 [1] : vector<3x392xf32> to vector<3xf32>
    %19 = vector.shape_cast %18 : vector<3xf32> to vector<3x1xf32>
    %cst_6 = arith.constant 0.00255102036 : f32
    %20 = vector.broadcast %cst_6 : f32 to vector<3x1xf32>
    %21 = arith.mulf %19, %20 : vector<3x1xf32>
    %22 = vector.broadcast %21 : vector<3x1xf32> to vector<3x392xf32>
    %23 = arith.subf %17, %22 : vector<3x392xf32>
    %24 = arith.mulf %23, %23 : vector<3x392xf32>
    %cst_7 = arith.constant dense<0.000000e+00> : vector<3xf32>
    %25 = vector.multi_reduction <add>, %24, %cst_7 [1] : vector<3x392xf32> to vector<3xf32>
    %26 = vector.shape_cast %25 : vector<3xf32> to vector<3x1xf32>
    %cst_8 = arith.constant 0.00255102036 : f32
    %27 = vector.broadcast %cst_8 : f32 to vector<3x1xf32>
    %28 = arith.mulf %26, %27 : vector<3x1xf32>
    %cst_9 = arith.constant 9.99999974E-6 : f32
    %29 = vector.broadcast %cst_9 : f32 to vector<3x1xf32>
    %30 = arith.addf %28, %29 : vector<3x1xf32>
    %31 = math.rsqrt %30 : vector<3x1xf32>
    %32 = vector.broadcast %31 : vector<3x1xf32> to vector<3x392xf32>
    %33 = arith.mulf %23, %32 : vector<3x392xf32>
    %cst_10 = arith.constant dense<0.000000e+00> : vector<3xf32>
    %34 = vector.multi_reduction <add>, %33, %cst_10 [1] : vector<3x392xf32> to vector<3xf32>
    %35 = vector.shape_cast %34 : vector<3xf32> to vector<3x1xf32>
    %cst_11 = arith.constant 0.00255102036 : f32
    %36 = vector.broadcast %cst_11 : f32 to vector<3x1xf32>
    %37 = arith.mulf %35, %36 : vector<3x1xf32>
    %38 = vector.broadcast %37 : vector<3x1xf32> to vector<3x392xf32>
    %39 = arith.subf %33, %38 : vector<3x392xf32>
    %40 = arith.mulf %39, %39 : vector<3x392xf32>
    %cst_12 = arith.constant dense<0.000000e+00> : vector<3xf32>
    %41 = vector.multi_reduction <add>, %40, %cst_12 [1] : vector<3x392xf32> to vector<3xf32>
    %42 = vector.shape_cast %41 : vector<3xf32> to vector<3x1xf32>
    %cst_13 = arith.constant 0.00255102036 : f32
    %43 = vector.broadcast %cst_13 : f32 to vector<3x1xf32>
    %44 = arith.mulf %42, %43 : vector<3x1xf32>
    %cst_14 = arith.constant 9.99999974E-6 : f32
    %45 = vector.broadcast %cst_14 : f32 to vector<3x1xf32>
    %46 = arith.addf %44, %45 : vector<3x1xf32>
    %47 = math.rsqrt %46 : vector<3x1xf32>
    %48 = vector.broadcast %47 : vector<3x1xf32> to vector<3x392xf32>
    %49 = arith.mulf %39, %48 : vector<3x392xf32>
    %c0_15 = arith.constant 0 : index
    %c0_16 = arith.constant 0 : index
    %50 = vector.load %arg2[%c0_15, %c0_16] : memref<3x1xf32, #tpu.memory_space<vmem>>, vector<3x1xf32>
    %51 = vector.broadcast %50 : vector<3x1xf32> to vector<3x392xf32>
    %52 = arith.mulf %49, %51 : vector<3x392xf32>
    %c0_17 = arith.constant 0 : index
    %c0_18 = arith.constant 0 : index
    %53 = vector.load %arg3[%c0_17, %c0_18] : memref<3x1xf32, #tpu.memory_space<vmem>>, vector<3x1xf32>
    %54 = vector.broadcast %53 : vector<3x1xf32> to vector<3x392xf32>
    %55 = arith.addf %52, %54 : vector<3x392xf32>
    %cst_19 = arith.constant 0.000000e+00 : f32
    %56 = vector.broadcast %cst_19 : f32 to vector<3x392xf32>
    %57 = arith.maximumf %55, %56 : vector<3x392xf32>
    %cst_20 = arith.constant dense<0.000000e+00> : vector<3xf32>
    %58 = vector.multi_reduction <add>, %57, %cst_20 [1] : vector<3x392xf32> to vector<3xf32>
    %59 = vector.shape_cast %58 : vector<3xf32> to vector<3x1xf32>
    %cst_21 = arith.constant 0.00255102036 : f32
    %60 = vector.broadcast %cst_21 : f32 to vector<3x1xf32>
    %61 = arith.mulf %59, %60 : vector<3x1xf32>
    %62 = vector.broadcast %61 : vector<3x1xf32> to vector<3x392xf32>
    %63 = arith.subf %57, %62 : vector<3x392xf32>
    %64 = arith.mulf %63, %63 : vector<3x392xf32>
    %cst_22 = arith.constant dense<0.000000e+00> : vector<3xf32>
    %65 = vector.multi_reduction <add>, %64, %cst_22 [1] : vector<3x392xf32> to vector<3xf32>
    %66 = vector.shape_cast %65 : vector<3xf32> to vector<3x1xf32>
    %cst_23 = arith.constant 0.00255102036 : f32
    %67 = vector.broadcast %cst_23 : f32 to vector<3x1xf32>
    %68 = arith.mulf %66, %67 : vector<3x1xf32>
    %cst_24 = arith.constant 9.99999974E-6 : f32
    %69 = vector.broadcast %cst_24 : f32 to vector<3x1xf32>
    %70 = arith.addf %68, %69 : vector<3x1xf32>
    %71 = math.rsqrt %70 : vector<3x1xf32>
    %72 = vector.broadcast %71 : vector<3x1xf32> to vector<3x392xf32>
    %73 = arith.mulf %63, %72 : vector<3x392xf32>
    %cst_25 = arith.constant 0.000000e+00 : f32
    %74 = vector.broadcast %cst_25 : f32 to vector<3x392xf32>
    %75 = arith.maximumf %73, %74 : vector<3x392xf32>
    %c0_26 = arith.constant 0 : index
    %c0_27 = arith.constant 0 : index
    %76 = vector.load %arg4[%c0_26, %c0_27] : memref<3x392xf32, #tpu.memory_space<vmem>>, vector<3x392xf32>
    tpu.vector_store %arg4[%c0_26, %c0_27], %75 {strides = array<i32>} : memref<3x392xf32, #tpu.memory_space<vmem>>, vector<3x392xf32>,
    return
  }
}

</mosaic_0001>

<llo_original>
// kernel: model_forward.1
$region0: #{model_forward.1}
  #allocation0 [shape = 'u32[]', space=smem, size = 0x4, offset = 0x4, fixed_abs, tag = 'smem constant byte address 0x4 - core index']
  #allocation1 [shape = 'u32[72,128]{1,0:T(1,128)}', space=vmem, size = 0x9000, scoped, tag = 'internal scratch']
  %s0 = inlined_call_operand.vmem [shape: f32[27,392], index: 0, kind: input, shape index: {}]
  %s1 = inlined_call_operand.vmem [shape: f32[27,3], index: 1, kind: input, shape index: {}]
  %s2 = inlined_call_operand.vmem [shape: f32[3,1], index: 2, kind: input, shape index: {}]
  %s3 = inlined_call_operand.vmem [shape: f32[3,1], index: 3, kind: input, shape index: {}]
  %s4 = inlined_call_operand.vmem [shape: f32[3,392], index: 4, kind: output, shape index: {}]
  %s5 = sld [smem:[#allocation0]]
  $region26: #{model_forward.1} parent=0
    _
  %s7 = ssub.s32 1, %s5
  %s8 = scalar_select 0, %s7, %s5
  // Predicated region
  $region2: #{model_forward.1} parent=0 // pred_check
    _
  $region3: #{model_forward.1} parent=0 // pred_check_branch
    %10 = sbr.rel (0) target = $region5
  $region4: #{model_forward.1} parent=0 // pred_region
    _
  $region5: #{model_forward.1} parent=0 // pred_fallthru
    _
  // Predicated region
  $region6: #{model_forward.1} parent=0 // pred_check
    _
  $region7: #{model_forward.1} parent=0 // pred_check_branch
    %12 = sbr.rel (0) target = $region9
  $region8: #{model_forward.1} parent=0 // pred_region
    _
  $region9: #{model_forward.1} parent=0 // pred_fallthru
    _
  // Predicated region
  $region10: #{model_forward.1} parent=0 // pred_check
    _
  $region11: #{model_forward.1} parent=0 // pred_check_branch
    %14 = sbr.rel (0) target = $region13
  $region12: #{model_forward.1} parent=0 // pred_region
    _
  $region13: #{model_forward.1} parent=0 // pred_fallthru
    _
  // Predicated region
  $region14: #{model_forward.1} parent=0 // pred_check
    _
  $region15: #{model_forward.1} parent=0 // pred_check_branch
    %16 = sbr.rel (0) target = $region17
  $region16: #{model_forward.1} parent=0 // pred_region
    _
  $region17: #{model_forward.1} parent=0 // pred_fallthru
    _
  %v17 = vld [vmem:[%s0] sm:$0xff]
  %v18 = vld [vmem:[%s0 + $0x8] sm:$0xff]
  %v19 = vld [vmem:[%s0 + $0x10] sm:$0xff]
  %v20 = vld [vmem:[%s0 + $0x18] sm:$0xff]
  %v21 = vld [vmem:[%s0 + $0x20] sm:$0xff]
  %v22 = vld [vmem:[%s0 + $0x28] sm:$0xff]
  %v23 = vld [vmem:[%s0 + $0x30] sm:$0xff]
  %v24 = vld [vmem:[%s0 + $0x38] sm:$0xff]
  %v25 = vld [vmem:[%s0 + $0x40] sm:$0xff]
  %v26 = vld [vmem:[%s0 + $0x48] sm:$0xff]
  %v27 = vld [vmem:[%s0 + $0x50] sm:$0xff]
  %v28 = vld [vmem:[%s0 + $0x58] sm:$0xff]
  %v29 = vld [vmem:[%s0 + $0x60] sm:$0x7]
  %v30 = vld [vmem:[%s0 + $0x68] sm:$0x7]
  %v31 = vld [vmem:[%s0 + $0x70] sm:$0x7]
  %v32 = vld [vmem:[%s0 + $0x78] sm:$0x7]
  %v33 = vld [vmem:[%s1] sm:$0xff]
  %v34 = vld [vmem:[%s1 + $0x8] sm:$0xff]
  %v35 = vld [vmem:[%s1 + $0x10] sm:$0xff]
  %v36 = vld [vmem:[%s1 + $0x18] sm:$0x7]
  %38 = vset.pattern.permute.xlu0 0
  %39 = vperm.xlu0 %38, %v33
  %v40 = vpop.permute.xlu0 %39
  %43 = vset.pattern.permute.xlu0 0
  %44 = vperm.xlu0 %43, %v34
  %v45 = vpop.permute.xlu0 %44
  %48 = vset.pattern.permute.xlu0 0
  %49 = vperm.xlu0 %48, %v35
  %v50 = vpop.permute.xlu0 %49
  %53 = vset.pattern.permute.xlu0 0
  %54 = vperm.xlu0 %53, %v36
  %v55 = vpop.permute.xlu0 %54
  %v57 = vmul.f32 %v17, %v40
  %v58 = vmul.f32 %v18, %v40
  %v59 = vmul.f32 %v19, %v40
  %v60 = vmul.f32 %v20, %v40
  %v61 = vmul.f32 %v21, %v45
  %v62 = vmul.f32 %v22, %v45
  %v63 = vmul.f32 %v23, %v45
  %v64 = vmul.f32 %v24, %v45
  %v65 = vmul.f32 %v25, %v50
  %v66 = vmul.f32 %v26, %v50
  %v67 = vmul.f32 %v27, %v50
  %v68 = vmul.f32 %v28, %v50
  %v69 = vmul.f32 %v29, %v55
  %v70 = vmul.f32 %v30, %v55
  %v71 = vmul.f32 %v31, %v55
  %v72 = vmul.f32 %v32, %v55
  %v73 = vadd.f32 %v57, %v61
  %v74 = vadd.f32 %v73, %v65
  %vm75 = vcmask 1042432
  %v76 = vsel %vm75, %v69, 0.0
  %v77 = vadd.f32 %v74, %v76
  %v78 = vrot.slane %v77, 4
  %v79 = vadd.f32 %v77, %v78
  %v80 = vrot.slane %v79, 2
  %v81 = vadd.f32 %v79, %v80
  %v82 = vrot.slane %v81, 1
  %v83 = vadd.f32 %v81, %v82
  %v84 = vadd.f32 %v58, %v62
  %v85 = vadd.f32 %v84, %v66
  %v86 = vsel %vm75, %v70, 0.0
  %v87 = vadd.f32 %v85, %v86
  %v88 = vrot.slane %v87, 4
  %v89 = vadd.f32 %v87, %v88
  %v90 = vrot.slane %v89, 2
  %v91 = vadd.f32 %v89, %v90
  %v92 = vrot.slane %v91, 1
  %v93 = vadd.f32 %v91, %v92
  %v94 = vadd.f32 %v59, %v63
  %v95 = vadd.f32 %v94, %v67
  %v96 = vsel %vm75, %v71, 0.0
  %v97 = vadd.f32 %v95, %v96
  %v98 = vrot.slane %v97, 4
  %v99 = vadd.f32 %v97, %v98
  %v100 = vrot.slane %v99, 2
  %v101 = vadd.f32 %v99, %v100
  %v102 = vrot.slane %v101, 1
  %v103 = vadd.f32 %v101, %v102
  %vm104 = vcmask 64512
  %v105 = vsel %vm104, %v60, 0.0
  %v106 = vsel %vm104, %v64, 0.0
  %v107 = vadd.f32 %v105, %v106
  %v108 = vsel %vm104, %v68, 0.0
  %v109 = vadd.f32 %v107, %v108
  %vm110 = vcmask 59392
  %v111 = vsel %vm110, %v72, 0.0
  %v112 = vadd.f32 %v109, %v111
  %v113 = vrot.slane %v112, 4
  %v114 = vadd.f32 %v112, %v113
  %v115 = vrot.slane %v114, 2
  %v116 = vadd.f32 %v114, %v115
  %v117 = vrot.slane %v116, 1
  %v118 = vadd.f32 %v116, %v117
  %119 = vset.pattern.permute.xlu0 1
  %120 = vperm.xlu0 %119, %v33
  %v121 = vpop.permute.xlu0 %120
  %123 = vset.pattern.permute.xlu0 1
  %124 = vperm.xlu0 %123, %v34
  %v125 = vpop.permute.xlu0 %124
  %127 = vset.pattern.permute.xlu0 1
  %128 = vperm.xlu0 %127, %v35
  %v129 = vpop.permute.xlu0 %128
  %131 = vset.pattern.permute.xlu0 1
  %132 = vperm.xlu0 %131, %v36
  %v133 = vpop.permute.xlu0 %132
  %v135 = vmul.f32 %v17, %v121
  %v136 = vmul.f32 %v18, %v121
  %v137 = vmul.f32 %v19, %v121
  %v138 = vmul.f32 %v20, %v121
  %v139 = vmul.f32 %v21, %v125
  %v140 = vmul.f32 %v22, %v125
  %v141 = vmul.f32 %v23, %v125
  %v142 = vmul.f32 %v24, %v125
  %v143 = vmul.f32 %v25, %v129
  %v144 = vmul.f32 %v26, %v129
  %v145 = vmul.f32 %v27, %v129
  %v146 = vmul.f32 %v28, %v129
  %v147 = vmul.f32 %v29, %v133
  %v148 = vmul.f32 %v30, %v133
  %v149 = vmul.f32 %v31, %v133
  %v150 = vmul.f32 %v32, %v133
  %v151 = vadd.f32 %v135, %v139
  %v152 = vadd.f32 %v151, %v143
  %v153 = vsel %vm75, %v147, 0.0
  %v154 = vadd.f32 %v152, %v153
  %v155 = vrot.slane %v154, 4
  %v156 = vadd.f32 %v154, %v155
  %v157 = vrot.slane %v156, 2
  %v158 = vadd.f32 %v156, %v157
  %v159 = vrot.slane %v158, 1
  %v160 = vadd.f32 %v158, %v159
  %v161 = vadd.f32 %v136, %v140
  %v162 = vadd.f32 %v161, %v144
  %v163 = vsel %vm75, %v148, 0.0
  %v164 = vadd.f32 %v162, %v163
  %v165 = vrot.slane %v164, 4
  %v166 = vadd.f32 %v164, %v165
  %v167 = vrot.slane %v166, 2
  %v168 = vadd.f32 %v166, %v167
  %v169 = vrot.slane %v168, 1
  %v170 = vadd.f32 %v168, %v169
  %v171 = vadd.f32 %v137, %v141
  %v172 = vadd.f32 %v171, %v145
  %v173 = vsel %vm75, %v149, 0.0
  %v174 = vadd.f32 %v172, %v173
  %v175 = vrot.slane %v174, 4
  %v176 = vadd.f32 %v174, %v175
  %v177 = vrot.slane %v176, 2
  %v178 = vadd.f32 %v176, %v177
  %v179 = vrot.slane %v178, 1
  %v180 = vadd.f32 %v178, %v179
  %v181 = vsel %vm104, %v138, 0.0
  %v182 = vsel %vm104, %v142, 0.0
  %v183 = vadd.f32 %v181, %v182
  %v184 = vsel %vm104, %v146, 0.0
  %v185 = vadd.f32 %v183, %v184
  %v186 = vsel %vm110, %v150, 0.0
  %v187 = vadd.f32 %v185, %v186
  %v188 = vrot.slane %v187, 4
  %v189 = vadd.f32 %v187, %v188
  %v190 = vrot.slane %v189, 2
  %v191 = vadd.f32 %v189, %v190
  %v192 = vrot.slane %v191, 1
  %v193 = vadd.f32 %v191, %v192
  %194 = vset.pattern.permute.xlu0 2
  %195 = vperm.xlu0 %194, %v33
  %v196 = vpop.permute.xlu0 %195
  %198 = vset.pattern.permute.xlu0 2
  %199 = vperm.xlu0 %198, %v34
  %v200 = vpop.permute.xlu0 %199
  %202 = vset.pattern.permute.xlu0 2
  %203 = vperm.xlu0 %202, %v35
  %v204 = vpop.permute.xlu0 %203
  %206 = vset.pattern.permute.xlu0 2
  %207 = vperm.xlu0 %206, %v36
  %v208 = vpop.permute.xlu0 %207
  %v210 = vmul.f32 %v17, %v196
  %v211 = vmul.f32 %v18, %v196
  %v212 = vmul.f32 %v19, %v196
  %v213 = vmul.f32 %v20, %v196
  %v214 = vmul.f32 %v21, %v200
  %v215 = vmul.f32 %v22, %v200
  %v216 = vmul.f32 %v23, %v200
  %v217 = vmul.f32 %v24, %v200
  %v218 = vmul.f32 %v25, %v204
  %v219 = vmul.f32 %v26, %v204
  %v220 = vmul.f32 %v27, %v204
  %v221 = vmul.f32 %v28, %v204
  %v222 = vmul.f32 %v29, %v208
  %v223 = vmul.f32 %v30, %v208
  %v224 = vmul.f32 %v31, %v208
  %v225 = vmul.f32 %v32, %v208
  %v226 = vadd.f32 %v210, %v214
  %v227 = vadd.f32 %v226, %v218
  %v228 = vsel %vm75, %v222, 0.0
  %v229 = vadd.f32 %v227, %v228
  %v230 = vrot.slane %v229, 4
  %v231 = vadd.f32 %v229, %v230
  %v232 = vrot.slane %v231, 2
  %v233 = vadd.f32 %v231, %v232
  %v234 = vrot.slane %v233, 1
  %v235 = vadd.f32 %v233, %v234
  %v236 = vadd.f32 %v211, %v215
  %v237 = vadd.f32 %v236, %v219
  %v238 = vsel %vm75, %v223, 0.0
  %v239 = vadd.f32 %v237, %v238
  %v240 = vrot.slane %v239, 4
  %v241 = vadd.f32 %v239, %v240
  %v242 = vrot.slane %v241, 2
  %v243 = vadd.f32 %v241, %v242
  %v244 = vrot.slane %v243, 1
  %v245 = vadd.f32 %v243, %v244
  %v246 = vadd.f32 %v212, %v216
  %v247 = vadd.f32 %v246, %v220
  %v248 = vsel %vm75, %v224, 0.0
  %v249 = vadd.f32 %v247, %v248
  %v250 = vrot.slane %v249, 4
  %v251 = vadd.f32 %v249, %v250
  %v252 = vrot.slane %v251, 2
  %v253 = vadd.f32 %v251, %v252
  %v254 = vrot.slane %v253, 1
  %v255 = vadd.f32 %v253, %v254
  %v256 = vsel %vm104, %v213, 0.0
  %v257 = vsel %vm104, %v217, 0.0
  %v258 = vadd.f32 %v256, %v257
  %v259 = vsel %vm104, %v221, 0.0
  %v260 = vadd.f32 %v258, %v259
  %v261 = vsel %vm110, %v225, 0.0
  %v262 = vadd.f32 %v260, %v261
  %v263 = vrot.slane %v262, 4
  %v264 = vadd.f32 %v262, %v263
  %v265 = vrot.slane %v264, 2
  %v266 = vadd.f32 %v264, %v265
  %v267 = vrot.slane %v266, 1
  %v268 = vadd.f32 %v266, %v267
  %vm269 = vcmask 1040384
  %v270 = vsel %vm269, %v83, %v160
  %v271 = vsel %vm269, %v93, %v170
  %v272 = vsel %vm269, %v103, %v180
  %v273 = vsel %vm269, %v118, %v193
  %vm274 = vcmask 1041408
  %v275 = vsel %vm274, %v270, %v235
  %v276 = vsel %vm274, %v271, %v245
  %v277 = vsel %vm274, %v272, %v255
  %v278 = vsel %vm274, %v273, %v268
  %v279 = vsel %vm75, %v275, 0.0
  %v280 = vsel %vm75, %v276, 0.0
  %v281 = vadd.f32 %v279, %v280
  %v282 = vsel %vm75, %v277, 0.0
  %v283 = vadd.f32 %v281, %v282
  %v284 = vsel %vm110, %v278, 0.0
  %v285 = vadd.f32 %v283, %v284
  %286 = vadd.xlane.f32.xlu0 %v285
  %v287 = vpop.xlane.xlu0 %286
  %v288 = vmul.f32 %v287, 0.0025510204
  %v289 = vsub.f32 %v275, %v288
  %v290 = vsub.f32 %v276, %v288
  %v291 = vsub.f32 %v277, %v288
  %v292 = vsub.f32 %v278, %v288
  %v293 = vmul.f32 %v289, %v289
  %v294 = vmul.f32 %v290, %v290
  %v295 = vmul.f32 %v291, %v291
  %v296 = vmul.f32 %v292, %v292
  %v297 = vsel %vm75, %v293, 0.0
  %v298 = vsel %vm75, %v294, 0.0
  %v299 = vadd.f32 %v297, %v298
  %v300 = vsel %vm75, %v295, 0.0
  %v301 = vadd.f32 %v299, %v300
  %v302 = vsel %vm110, %v296, 0.0
  %v303 = vadd.f32 %v301, %v302
  %304 = vadd.xlane.f32.xlu0 %v303
  %v305 = vpop.xlane.xlu0 %304
  %v306 = vmul.f32 %v305, 0.0025510204
  %v307 = vadd.f32 %v306, 1e-05
  %v308 = vrsqrt.pop %v307
  %v309 = vmul.f32 %v308, %v307
  %v310 = vmul.f32 %v309, %v308
  %v311 = vmul.f32 0.5, %v310
  %v312 = vsub.f32 1.5, %v311
  %v313 = vmul.f32 %v308, %v312
  %vm314 = vweird.f32 %v307
  %vm315 = vweird.f32 %v308
  %vm316 = vmor %vm314, %vm315
  %v317 = vsel %vm316, %v308, %v313
  %v318 = vmul.f32 %v289, %v317
  %v319 = vmul.f32 %v290, %v317
  %v320 = vmul.f32 %v291, %v317
  %v321 = vmul.f32 %v292, %v317
  %v322 = vsel %vm75, %v318, 0.0
  %v323 = vsel %vm75, %v319, 0.0
  %v324 = vadd.f32 %v322, %v323
  %v325 = vsel %vm75, %v320, 0.0
  %v326 = vadd.f32 %v324, %v325
  %v327 = vsel %vm110, %v321, 0.0
  %v328 = vadd.f32 %v326, %v327
  %329 = vadd.xlane.f32.xlu0 %v328
  %v330 = vpop.xlane.xlu0 %329
  %v331 = vmul.f32 %v330, 0.0025510204
  %v332 = vsub.f32 %v318, %v331
  %v333 = vsub.f32 %v319, %v331
  %v334 = vsub.f32 %v320, %v331
  %v335 = vsub.f32 %v321, %v331
  %v336 = vmul.f32 %v332, %v332
  %v337 = vmul.f32 %v333, %v333
  %v338 = vmul.f32 %v334, %v334
  %v339 = vmul.f32 %v335, %v335
  %v340 = vsel %vm75, %v336, 0.0
  %v341 = vsel %vm75, %v337, 0.0
  %v342 = vadd.f32 %v340, %v341
  %v343 = vsel %vm75, %v338, 0.0
  %v344 = vadd.f32 %v342, %v343
  %v345 = vsel %vm110, %v339, 0.0
  %v346 = vadd.f32 %v344, %v345
  %347 = vadd.xlane.f32.xlu0 %v346
  %v348 = vpop.xlane.xlu0 %347
  %v349 = vmul.f32 %v348, 0.0025510204
  %v350 = vadd.f32 %v349, 1e-05
  %v351 = vrsqrt.pop %v350
  %v352 = vmul.f32 %v351, %v350
  %v353 = vmul.f32 %v352, %v351
  %v354 = vmul.f32 0.5, %v353
  %v355 = vsub.f32 1.5, %v354
  %v356 = vmul.f32 %v351, %v355
  %vm357 = vweird.f32 %v350
  %vm358 = vweird.f32 %v351
  %vm359 = vmor %vm357, %vm358
  %v360 = vsel %vm359, %v351, %v356
  %v361 = vmul.f32 %v332, %v360
  %v362 = vmul.f32 %v333, %v360
  %v363 = vmul.f32 %v334, %v360
  %v364 = vmul.f32 %v335, %v360
  %v365 = vld [vmem:[%s2] sm:$0x7]
  %367 = vset.pattern.permute.xlu0 0
  %368 = vperm.xlu0 %367, %v365
  %v369 = vpop.permute.xlu0 %368
  %v371 = vmul.f32 %v361, %v369
  %v372 = vmul.f32 %v362, %v369
  %v373 = vmul.f32 %v363, %v369
  %v374 = vmul.f32 %v364, %v369
  %v375 = vld [vmem:[%s3] sm:$0x7]
  %377 = vset.pattern.permute.xlu0 0
  %378 = vperm.xlu0 %377, %v375
  %v379 = vpop.permute.xlu0 %378
  %v381 = vadd.f32 %v371, %v379
  %v382 = vadd.f32 %v372, %v379
  %v383 = vadd.f32 %v373, %v379
  %v384 = vadd.f32 %v374, %v379
  %v385 = vmax.f32 %v381, 0.0
  %v386 = vmax.f32 %v382, 0.0
  %v387 = vmax.f32 %v383, 0.0
  %v388 = vmax.f32 %v384, 0.0
  %v389 = vsel %vm75, %v385, 0.0
  %v390 = vsel %vm75, %v386, 0.0
  %v391 = vadd.f32 %v389, %v390
  %v392 = vsel %vm75, %v387, 0.0
  %v393 = vadd.f32 %v391, %v392
  %v394 = vsel %vm110, %v388, 0.0
  %v395 = vadd.f32 %v393, %v394
  %396 = vadd.xlane.f32.xlu0 %v395
  %v397 = vpop.xlane.xlu0 %396
  %v398 = vmul.f32 %v397, 0.0025510204
  %v399 = vsub.f32 %v385, %v398
  %v400 = vsub.f32 %v386, %v398
  %v401 = vsub.f32 %v387, %v398
  %v402 = vsub.f32 %v388, %v398
  %v403 = vmul.f32 %v399, %v399
  %v404 = vmul.f32 %v400, %v400
  %v405 = vmul.f32 %v401, %v401
  %v406 = vmul.f32 %v402, %v402
  %v407 = vsel %vm75, %v403, 0.0
  %v408 = vsel %vm75, %v404, 0.0
  %v409 = vadd.f32 %v407, %v408
  %v410 = vsel %vm75, %v405, 0.0
  %v411 = vadd.f32 %v409, %v410
  %v412 = vsel %vm110, %v406, 0.0
  %v413 = vadd.f32 %v411, %v412
  %414 = vadd.xlane.f32.xlu0 %v413
  %v415 = vpop.xlane.xlu0 %414
  %v416 = vmul.f32 %v415, 0.0025510204
  %v417 = vadd.f32 %v416, 1e-05
  %v418 = vrsqrt.pop %v417
  %v419 = vmul.f32 %v418, %v417
  %v420 = vmul.f32 %v419, %v418
  %v421 = vmul.f32 0.5, %v420
  %v422 = vsub.f32 1.5, %v421
  %v423 = vmul.f32 %v418, %v422
  %vm424 = vweird.f32 %v417
  %vm425 = vweird.f32 %v418
  %vm426 = vmor %vm424, %vm425
  %v427 = vsel %vm426, %v418, %v423
  %v428 = vmul.f32 %v399, %v427
  %v429 = vmul.f32 %v400, %v427
  %v430 = vmul.f32 %v401, %v427
  %v431 = vmul.f32 %v402, %v427
  %v432 = vmax.f32 %v428, 0.0
  %v433 = vmax.f32 %v429, 0.0
  %v434 = vmax.f32 %v430, 0.0
  %v435 = vmax.f32 %v431, 0.0
  %v440 = vrot.slane %v433, 4
  %v441 = vrot.slane %v435, 4
  %vm442 = vcmask 1043456
  %v443 = vsel %vm442, %v432, %v440
  %v444 = vsel %vm442, %v434, %v441
  %447 = vst [vmem:[%s4] sm:$0x77] %v443
  %vm448 = vcmask 63492
  %vm449 = vmor %vm448, %vm75
  %450 = vst.msk [vmem:[%s4 + $0x8] sm:$0x77] %vm449, %v444
  // Predicated region
  $region18: #{model_forward.1} parent=0 // pred_check
    _
  $region19: #{model_forward.1} parent=0 // pred_check_branch
    %452 = sbr.rel (0) target = $region21
  $region20: #{model_forward.1} parent=0 // pred_region
    _
  $region21: #{model_forward.1} parent=0 // pred_fallthru
    _
  // Predicated region
  $region22: #{model_forward.1} parent=0 // pred_check
    _
  $region23: #{model_forward.1} parent=0 // pred_check_branch
    %454 = sbr.rel (0) target = $region25
  $region24: #{model_forward.1} parent=0 // pred_region
    _
  $region25: #{model_forward.1} parent=0 // pred_fallthru
    _

</llo_original>
